<compile_context>
chip_gen: v6e
topology: v6e:2x2x1
jax: 0.10.0
libtpu: 0.0.40
codegen_flags: <defaults>
</compile_context>

<pallas_src>
import jax
import jax.numpy as jnp
from jax import lax
from jax.experimental import pallas as pl
from jax.experimental.pallas import tpu as pltpu


# Smallest per-generation scoped-VMEM default (v5e = 16 MiB; v6e/v7x = 32 MiB).
# Using the minimum keeps the single-shot decision valid on every generation.
_VMEM_BUDGET_BYTES = 16 * 1024 * 1024


def _feature_kernel(x_ref, w_ref, b_ref, o_ref):
    """Single-shot Flatten -> Linear -> ReLU.

    x_ref : (B, D)    f32 flattened image batch (whole array, VMEM resident)
    w_ref : (HID, D)  f32 Linear weight, native PyTorch (out, in) layout
    b_ref : (1, HID)  f32 Linear bias
    o_ref : (B, HID)  f32 output features
    """
    # In-VMEM bf16 cast (free on the VPU relative to the HBM DMA); HBM only
    # ever sees the operands once, in their native f32 form.
    x = x_ref[...].astype(jnp.bfloat16)
    w = w_ref[...].astype(jnp.bfloat16)

    # X @ W^T without materializing a transposed weight: contract axis 1 of
    # both operands (native transposed-rhs MXU path).
    acc = lax.dot_general(
        x,
        w,
        dimension_numbers=(((1,), (1,)), ((), ())),
        preferred_element_type=jnp.float32,
    )
    # f32 epilogue (bias add + ReLU) — keep f32 on all generations (v5e has no
    # bf16 VPU datapath).
    o_ref[...] = jnp.maximum(acc + b_ref[...], 0.0).astype(o_ref.dtype)


def feature_extractor_forward(img, w1, b1):
    """Pallas equivalent of FeatureExtractor.forward.

    img: (B, C, H, W) float32
    w1 : (HID, D)     Linear weight (PyTorch layout, D = C*H*W)
    b1 : (HID,)       Linear bias
    returns (B, HID) float32 features.
    """
    B = img.shape[0]
    D = img.shape[1] * img.shape[2] * img.shape[3]
    HID = w1.shape[0]
    assert w1.shape[1] == D, "weight in_features must equal C*H*W"

    # Flatten is pure layout glue (row-major == torch.flatten).  No dtype
    # casts here — that would add a full extra HBM pass over the operands.
    x = img.reshape(B, D).astype(jnp.float32)
    w = w1.astype(jnp.float32)
    b = b1.astype(jnp.float32).reshape(1, HID)

    # VMEM footprint for the single-shot kernel: f32 operands + in-kernel bf16
    # copies + f32 output.  Must fit the per-generation scoped VMEM budget.
    x_bytes = B * D * 4
    w_bytes = HID * D * 4
    b_bytes = HID * 4
    o_bytes = B * HID * 4
    footprint = (x_bytes + w_bytes) + (B * D + HID * D) * 2 + b_bytes + o_bytes
    assert footprint < _VMEM_BUDGET_BYTES, (
        "operands exceed the single-shot scoped-VMEM budget; a tiled K/N "
        "variant is required for this size"
    )

    # Advisory cost so XLA can overlap this tiny, launch-bound call.
    cost = pl.CostEstimate(
        flops=2 * B * D * HID,
        bytes_accessed=x_bytes + w_bytes + b_bytes + o_bytes,
        transcendentals=0,
    )

    return pl.pallas_call(
        _feature_kernel,
        out_shape=jax.ShapeDtypeStruct((B, HID), jnp.float32),
        in_specs=[
            pl.BlockSpec(memory_space=pltpu.MemorySpace.VMEM),  # X, whole array
            pl.BlockSpec(memory_space=pltpu.MemorySpace.VMEM),  # W, whole array
            pl.BlockSpec(memory_space=pltpu.MemorySpace.VMEM),  # bias
        ],
        out_specs=pl.BlockSpec(memory_space=pltpu.MemorySpace.VMEM),
        compiler_params=pltpu.CompilerParams(
            vmem_limit_bytes=_VMEM_BUDGET_BYTES,
        ),
        cost_estimate=cost,
    )(x, w, b)


if __name__ == "__main__":
    # Small shapes consistent with the module: batch=2, channels=4, spatial=16.
    B, C, H, W = 2, 4, 16, 16
    D = C * H * W          # 1024 = Linear in_features
    HID = 32               # hidden width == FeatureExtractor.num_features

    key = jax.random.PRNGKey(0)
    k_img, k_w, k_b = jax.random.split(key, 3)

    img = jax.random.normal(k_img, (B, C, H, W), dtype=jnp.float32)
    # Deterministic synthetic parameters (PyTorch Linear layout: (out, in)).
    w1 = jax.random.normal(k_w, (HID, D), dtype=jnp.float32) * 0.02
    b1 = jax.random.normal(k_b, (HID,), dtype=jnp.float32) * 0.02

    out = feature_extractor_forward(img, w1, b1)
    out = jax.block_until_ready(out)

    # Pure-JAX reference of Flatten -> Linear -> ReLU, mirroring the kernel's
    # in-MXU bf16 rounding of the matmul operands (f32 accumulation), so the
    # only remaining difference is accumulation order.
    xq = img.reshape(B, D).astype(jnp.bfloat16).astype(jnp.float32)
    wq = w1.astype(jnp.bfloat16).astype(jnp.float32)
    ref = jnp.maximum(xq @ wq.T + b1, 0.0)

    assert out.shape == (B, HID)
    assert out.dtype == jnp.float32
    assert jnp.allclose(out, ref, atol=1e-2, rtol=1e-2), "mismatch vs reference"

    print("KERNEL_OK")
</pallas_src>

<mosaic_0001>
module attributes {stable_mosaic.version = 11 : i64} {
  func.func @_feature_kernel(%arg0: memref<2x1024xf32, #tpu.memory_space<vmem>>, %arg1: memref<32x1024xf32, #tpu.memory_space<vmem>>, %arg2: memref<1x32xf32, #tpu.memory_space<vmem>>, %arg3: memref<2x32xf32, #tpu.memory_space<vmem>>) attributes {dimension_semantics = [], scalar_prefetch = 0 : i64, scratch_operands = 0 : i64, tpu.core_type = #tpu.core_type<tc>} {
    %c0 = arith.constant 0 : index
    %c0_0 = arith.constant 0 : index
    %0 = vector.load %arg0[%c0, %c0_0] : memref<2x1024xf32, #tpu.memory_space<vmem>>, vector<2x1024xf32>
    %1 = arith.truncf %0 : vector<2x1024xf32> to vector<2x1024xbf16>
    %c0_1 = arith.constant 0 : index
    %c0_2 = arith.constant 0 : index
    %2 = vector.load %arg1[%c0_1, %c0_2] : memref<32x1024xf32, #tpu.memory_space<vmem>>, vector<32x1024xf32>
    %3 = arith.truncf %2 : vector<32x1024xf32> to vector<32x1024xbf16>
    %cst = arith.constant dense<0.000000e+00> : vector<2x32xf32>
    %4 = tpu.matmul %1, %3, %cst {dimension_numbers = #tpu.dot_dimension_numbers<[1], [1], [0], [0], [0, 0, 1, 0], [], []>} : vector<2x1024xbf16>, vector<32x1024xbf16>, vector<2x32xf32> -> vector<2x32xf32>
    %c0_3 = arith.constant 0 : index
    %c0_4 = arith.constant 0 : index
    %5 = vector.load %arg2[%c0_3, %c0_4] : memref<1x32xf32, #tpu.memory_space<vmem>>, vector<1x32xf32>
    %6 = vector.broadcast %5 : vector<1x32xf32> to vector<2x32xf32>
    %7 = arith.addf %4, %6 : vector<2x32xf32>
    %cst_5 = arith.constant 0.000000e+00 : f32
    %8 = vector.broadcast %cst_5 : f32 to vector<2x32xf32>
    %9 = arith.maximumf %7, %8 : vector<2x32xf32>
    %c0_6 = arith.constant 0 : index
    %c0_7 = arith.constant 0 : index
    %10 = vector.load %arg3[%c0_6, %c0_7] : memref<2x32xf32, #tpu.memory_space<vmem>>, vector<2x32xf32>
    tpu.vector_store %arg3[%c0_6, %c0_7], %9 {strides = array<i32>} : memref<2x32xf32, #tpu.memory_space<vmem>>, vector<2x32xf32>,
    return
  }
}

</mosaic_0001>

<llo_original>
// kernel: tpu_custom_call.1
$region0: #{tpu_custom_call.1}
  #allocation0 [shape = 'u32[]', space=smem, size = 0x4, offset = 0x4, fixed_abs, tag = 'smem constant byte address 0x4 - core index']
  #allocation1 [shape = 'u32[144,128]{1,0:T(1,128)}', space=vmem, size = 0x12000, scoped, tag = 'internal scratch']
  %s0 = inlined_call_operand.hbm [shape: f32[2,1024], index: 0, kind: input, shape index: {}]
  %s1 = inlined_call_operand.hbm [shape: f32[32,1024], index: 1, kind: input, shape index: {}]
  %s2 = inlined_call_operand.vmem [shape: f32[1,32], index: 2, kind: input, shape index: {}]
  %s3 = inlined_call_operand.hbm [shape: f32[2,32], index: 3, kind: output, shape index: {}]
  %s4 = sld [smem:[#allocation0]]
  $region30: #{tpu_custom_call.1} parent=0
    _
  %s6 = ssub.s32 1, %s4
  %s7 = scalar_select 0, %s6, %s4
  $region1: #{tpu_custom_call.1} parent=0
    #allocation2 [shape = 'u8[8192]{0}', space=vmem, size = 0x2000, scoped, tag = 'input window, operand 0, single buffered']
    #allocation3 [shape = 's32[1]{0}', space=sflag, size = 0x4, scoped, tag = 'scoped memory for tpu_custom_call.1']
    #allocation4 [shape = 's32[1]{0}', space=sflag, size = 0x4, scoped, tag = 'scoped memory for tpu_custom_call.1']
    #allocation5 [shape = 'u8[131072]{0}', space=vmem, size = 0x20000, scoped, tag = 'input window, operand 1, single buffered']
    #allocation6 [shape = 's32[1]{0}', space=sflag, size = 0x4, scoped, tag = 'scoped memory for tpu_custom_call.1']
    #allocation7 [shape = 'u8[1024]{0}', space=vmem, size = 0x400, scoped, tag = 'output window, operand 0, single buffered']
    %8 = vsyncpa [#allocation3], 0
    %9 = vsyncpa [#allocation6], 0
    %10 = vsyncpa [#allocation4], 0
    // Predicated region
    $region2: #{tpu_custom_call.1} parent=1 // pred_check
      _
    $region3: #{tpu_custom_call.1} parent=1 // pred_check_branch
      %12 = sbr.rel (0) target = $region5
    $region4: #{tpu_custom_call.1} parent=1 // pred_region
      %s14 = ssub.s32 256, 256
      %15 = vsyncadd [#allocation3], %s14
      %s17 = sshll.u32 [#allocation2], 4
      %s18 = int_to_ptr.vmem [resolvable:$true] %s17
      %20 = dma.hbm_to_vmem [thread:$0]  %s0, 256, %s18, [#allocation3]
    $region5: #{tpu_custom_call.1} parent=1 // pred_fallthru
      _
    // Predicated region
    $region6: #{tpu_custom_call.1} parent=1 // pred_check
      _
    $region7: #{tpu_custom_call.1} parent=1 // pred_check_branch
      %22 = sbr.rel (0) target = $region9
    $region8: #{tpu_custom_call.1} parent=1 // pred_region
      %s24 = ssub.s32 4096, 4096
      %25 = vsyncadd [#allocation6], %s24
      %s26 = sshll.u32 [#allocation5], 4
      %s27 = int_to_ptr.vmem [resolvable:$true] %s26
      %32 = dma.hbm_to_vmem [thread:$0]  %s1, 4096, %s27, [#allocation6], 1024, 1024, 64
    $region9: #{tpu_custom_call.1} parent=1 // pred_fallthru
      _
    // Predicated region
    $region10: #{tpu_custom_call.1} parent=1 // pred_check
      _
    $region11: #{tpu_custom_call.1} parent=1 // pred_check_branch
      %34 = sbr.rel (0) target = $region13
    $region12: #{tpu_custom_call.1} parent=1 // pred_region
      _
    $region13: #{tpu_custom_call.1} parent=1 // pred_fallthru
      _
    // Predicated region
    $region14: #{tpu_custom_call.1} parent=1 // pred_check
      _
    $region15: #{tpu_custom_call.1} parent=1 // pred_check_branch
      %36 = sbr.rel (0) target = $region17
    $region16: #{tpu_custom_call.1} parent=1 // pred_region
      %37 = dma.done [#allocation3], 256
    $region17: #{tpu_custom_call.1} parent=1 // pred_fallthru
      _
    // Predicated region
    $region18: #{tpu_custom_call.1} parent=1 // pred_check
      _
    $region19: #{tpu_custom_call.1} parent=1 // pred_check_branch
      %39 = sbr.rel (0) target = $region21
    $region20: #{tpu_custom_call.1} parent=1 // pred_region
      %40 = dma.done [#allocation6], 4096
    $region21: #{tpu_custom_call.1} parent=1 // pred_fallthru
      _
    %v42 = vld [vmem:[#allocation2] sm:$0xff]
    %v43 = vld [vmem:[#allocation2 + $0x8] sm:$0xff]
    %v46 = vcombine.high %v42, %v42
    %v48 = vunpack.c.l.s4 1983009808
    %v49 = vunpack.c.0.s8 %v48
    %v50 = vlaneseq
    %v51 = vshrl.u32 %v50, 7
    %v52 = vsub.s32 %v49, %v51
    %v53 = vrot.slane %v42, %v52
    %v55 = vunpack.c.l.s4 1983009808
    %v56 = vunpack.c.0.s8 %v55
    %v57 = vlaneseq
    %v58 = vshrl.u32 %v57, 7
    %v59 = vsub.s32 %v56, %v58
    %v60 = vrot.slane %v46, %v59
    %v61 = vcombine.high %v53, %v53
    %v62 = vcombine.high %v60, %v60
    %v63 = vcombine.high %v43, %v43
    %v65 = vunpack.c.l.s4 1983009808
    %v66 = vunpack.c.0.s8 %v65
    %v67 = vlaneseq
    %v68 = vshrl.u32 %v67, 7
    %v69 = vsub.s32 %v66, %v68
    %v70 = vrot.slane %v43, %v69
    %v72 = vunpack.c.l.s4 1983009808
    %v73 = vunpack.c.0.s8 %v72
    %v74 = vlaneseq
    %v75 = vshrl.u32 %v74, 7
    %v76 = vsub.s32 %v73, %v75
    %v77 = vrot.slane %v63, %v76
    %v78 = vcombine.high %v70, %v70
    %v79 = vcombine.high %v77, %v77
    %v88 = vpack.c.bf16 %v53, %v53
    %v89 = vpack.c.bf16 %v61, %v61
    %v90 = vpack.c.bf16 %v60, %v60
    %v91 = vpack.c.bf16 %v62, %v62
    %v92 = vpack.c.bf16 %v70, %v70
    %v93 = vpack.c.bf16 %v78, %v78
    %v94 = vpack.c.bf16 %v77, %v77
    %v95 = vpack.c.bf16 %v79, %v79
    %v96 = vld [vmem:[#allocation5] sm:$0xff]
    %v97 = vld [vmem:[#allocation5 + $0x8] sm:$0xff]
    %v98 = vld [vmem:[#allocation5 + $0x10] sm:$0xff]
    %v99 = vld [vmem:[#allocation5 + $0x18] sm:$0xff]
    %v100 = vld [vmem:[#allocation5 + $0x20] sm:$0xff]
    %v101 = vld [vmem:[#allocation5 + $0x28] sm:$0xff]
    %v102 = vld [vmem:[#allocation5 + $0x30] sm:$0xff]
    %v103 = vld [vmem:[#allocation5 + $0x38] sm:$0xff]
    %v104 = vld [vmem:[#allocation5 + $0x40] sm:$0xff]
    %v105 = vld [vmem:[#allocation5 + $0x48] sm:$0xff]
    %v106 = vld [vmem:[#allocation5 + $0x50] sm:$0xff]
    %v107 = vld [vmem:[#allocation5 + $0x58] sm:$0xff]
    %v108 = vld [vmem:[#allocation5 + $0x60] sm:$0xff]
    %v109 = vld [vmem:[#allocation5 + $0x68] sm:$0xff]
    %v110 = vld [vmem:[#allocation5 + $0x70] sm:$0xff]
    %v111 = vld [vmem:[#allocation5 + $0x78] sm:$0xff]
    %v112 = vld [vmem:[#allocation5 + $0x80] sm:$0xff]
    %v113 = vld [vmem:[#allocation5 + $0x88] sm:$0xff]
    %v114 = vld [vmem:[#allocation5 + $0x90] sm:$0xff]
    %v115 = vld [vmem:[#allocation5 + $0x98] sm:$0xff]
    %v116 = vld [vmem:[#allocation5 + $0xa0] sm:$0xff]
    %v117 = vld [vmem:[#allocation5 + $0xa8] sm:$0xff]
    %v118 = vld [vmem:[#allocation5 + $0xb0] sm:$0xff]
    %v119 = vld [vmem:[#allocation5 + $0xb8] sm:$0xff]
    %v120 = vld [vmem:[#allocation5 + $0xc0] sm:$0xff]
    %v121 = vld [vmem:[#allocation5 + $0xc8] sm:$0xff]
    %v122 = vld [vmem:[#allocation5 + $0xd0] sm:$0xff]
    %v123 = vld [vmem:[#allocation5 + $0xd8] sm:$0xff]
    %v124 = vld [vmem:[#allocation5 + $0xe0] sm:$0xff]
    %v125 = vld [vmem:[#allocation5 + $0xe8] sm:$0xff]
    %v126 = vld [vmem:[#allocation5 + $0xf0] sm:$0xff]
    %v127 = vld [vmem:[#allocation5 + $0xf8] sm:$0xff]
    %v128 = vpack.c.bf16 %v104, %v96
    %v129 = vpack.c.bf16 %v105, %v97
    %v130 = vpack.c.bf16 %v106, %v98
    %v131 = vpack.c.bf16 %v107, %v99
    %v132 = vpack.c.bf16 %v108, %v100
    %v133 = vpack.c.bf16 %v109, %v101
    %v134 = vpack.c.bf16 %v110, %v102
    %v135 = vpack.c.bf16 %v111, %v103
    %v136 = vpack.c.bf16 %v120, %v112
    %v137 = vpack.c.bf16 %v121, %v113
    %v138 = vpack.c.bf16 %v122, %v114
    %v139 = vpack.c.bf16 %v123, %v115
    %v140 = vpack.c.bf16 %v124, %v116
    %v141 = vpack.c.bf16 %v125, %v117
    %v142 = vpack.c.bf16 %v126, %v118
    %v143 = vpack.c.bf16 %v127, %v119
    %v144 = vld [vmem:[%s2] sm:$0x1]
    %v146 = vlaneseq
    %v147 = vshrl.u32 %v146, 7
    %v148 = vsub.s32 0, %v147
    %v149 = vrot.slane %v144, %v148
    %151 = vmatprep.subr.bf16.mxu0 0
    %152 = vmatpush1.bf16.xpose.msra.mxu0 0
    %153 = vmatprep.subr.bf16.mxu0 0
    %154 = vmatpush1.bf16.xpose.msra.mxu0 0
    %155 = vmatprep.subr.bf16.mxu0 0
    %156 = vmatpush1.bf16.xpose.msra.mxu0 0
    %157 = vmatprep.subr.bf16.mxu0 0
    %158 = vmatpush1.bf16.xpose.msra.mxu0 0
    %159 = vmatprep.subr.bf16.mxu0 0
    %160 = vmatpush1.bf16.xpose.msra.mxu0 0
    %161 = vmatprep.subr.bf16.mxu0 0
    %162 = vmatpush1.bf16.xpose.msra.mxu0 0
    %163 = vmatprep.subr.bf16.mxu0 %v137
    %164 = vmatpush1.bf16.xpose.msra.mxu0 %v136
    %165 = vmatprep.subr.bf16.mxu0 %v129
    %166 = vmatpush1.bf16.xpose.msra.mxu0 %v128
    %167 = vmatprep.subr.bf16.mxu0 0
    %168 = vmatpush2.bf16.xpose.msra.mxu0 0
    %169 = vmatprep.subr.bf16.mxu0 0
    %170 = vmatpush2.bf16.xpose.msra.mxu0 0
    %171 = vmatprep.subr.bf16.mxu0 0
    %172 = vmatpush2.bf16.xpose.msra.mxu0 0
    %173 = vmatprep.subr.bf16.mxu0 0
    %174 = vmatpush2.bf16.xpose.msra.mxu0 0
    %175 = vmatprep.subr.bf16.mxu0 0
    %176 = vmatpush2.bf16.xpose.msra.mxu0 0
    %177 = vmatprep.subr.bf16.mxu0 0
    %178 = vmatpush2.bf16.xpose.msra.mxu0 0
    %179 = vmatprep.subr.bf16.mxu0 0
    %180 = vmatpush2.bf16.xpose.msra.mxu0 0
    %181 = vmatprep.subr.bf16.mxu0 0
    %182 = vmatpush2.bf16.xpose.msra.mxu0 0
    %183 = vmatprep.mubr.bf16.mxu0 %v89
    %184 = vmatmul.mubr.bf16.gmra.mxu0 %v88
    %v185 = vpop.f32.mrf.mxu0
    %v186 = vadd.f32 %v149, %v185
    %v187 = vpop.f32.mrf.mxu0
    %v188 = vpop.f32.mrf.mxu0
    %v189 = vpop.f32.mrf.mxu0
    %190 = vdwg.mxu0
    %191 = vmatprep.subr.bf16.mxu0 0
    %192 = vmatpush1.bf16.xpose.msra.mxu0 0
    %193 = vmatprep.subr.bf16.mxu0 0
    %194 = vmatpush1.bf16.xpose.msra.mxu0 0
    %195 = vmatprep.subr.bf16.mxu0 0
    %196 = vmatpush1.bf16.xpose.msra.mxu0 0
    %197 = vmatprep.subr.bf16.mxu0 0
    %198 = vmatpush1.bf16.xpose.msra.mxu0 0
    %199 = vmatprep.subr.bf16.mxu0 0
    %200 = vmatpush1.bf16.xpose.msra.mxu0 0
    %201 = vmatprep.subr.bf16.mxu0 0
    %202 = vmatpush1.bf16.xpose.msra.mxu0 0
    %203 = vmatprep.subr.bf16.mxu0 %v139
    %204 = vmatpush1.bf16.xpose.msra.mxu0 %v138
    %205 = vmatprep.subr.bf16.mxu0 %v131
    %206 = vmatpush1.bf16.xpose.msra.mxu0 %v130
    %207 = vmatprep.subr.bf16.mxu0 0
    %208 = vmatpush2.bf16.xpose.msra.mxu0 0
    %209 = vmatprep.subr.bf16.mxu0 0
    %210 = vmatpush2.bf16.xpose.msra.mxu0 0
    %211 = vmatprep.subr.bf16.mxu0 0
    %212 = vmatpush2.bf16.xpose.msra.mxu0 0
    %213 = vmatprep.subr.bf16.mxu0 0
    %214 = vmatpush2.bf16.xpose.msra.mxu0 0
    %215 = vmatprep.subr.bf16.mxu0 0
    %216 = vmatpush2.bf16.xpose.msra.mxu0 0
    %217 = vmatprep.subr.bf16.mxu0 0
    %218 = vmatpush2.bf16.xpose.msra.mxu0 0
    %219 = vmatprep.subr.bf16.mxu0 0
    %220 = vmatpush2.bf16.xpose.msra.mxu0 0
    %221 = vmatprep.subr.bf16.mxu0 0
    %222 = vmatpush2.bf16.xpose.msra.mxu0 0
    %223 = vmatprep.mubr.bf16.mxu0 %v91
    %224 = vmatmul.mubr.bf16.gmra.mxu0 %v90
    %v225 = vpop.f32.mrf.mxu0
    %v226 = vadd.f32 %v186, %v225
    %v227 = vpop.f32.mrf.mxu0
    %v228 = vpop.f32.mrf.mxu0
    %v229 = vpop.f32.mrf.mxu0
    %230 = vdwg.mxu0
    %231 = vmatprep.subr.bf16.mxu0 0
    %232 = vmatpush1.bf16.xpose.msra.mxu0 0
    %233 = vmatprep.subr.bf16.mxu0 0
    %234 = vmatpush1.bf16.xpose.msra.mxu0 0
    %235 = vmatprep.subr.bf16.mxu0 0
    %236 = vmatpush1.bf16.xpose.msra.mxu0 0
    %237 = vmatprep.subr.bf16.mxu0 0
    %238 = vmatpush1.bf16.xpose.msra.mxu0 0
    %239 = vmatprep.subr.bf16.mxu0 0
    %240 = vmatpush1.bf16.xpose.msra.mxu0 0
    %241 = vmatprep.subr.bf16.mxu0 0
    %242 = vmatpush1.bf16.xpose.msra.mxu0 0
    %243 = vmatprep.subr.bf16.mxu0 %v141
    %244 = vmatpush1.bf16.xpose.msra.mxu0 %v140
    %245 = vmatprep.subr.bf16.mxu0 %v133
    %246 = vmatpush1.bf16.xpose.msra.mxu0 %v132
    %247 = vmatprep.subr.bf16.mxu0 0
    %248 = vmatpush2.bf16.xpose.msra.mxu0 0
    %249 = vmatprep.subr.bf16.mxu0 0
    %250 = vmatpush2.bf16.xpose.msra.mxu0 0
    %251 = vmatprep.subr.bf16.mxu0 0
    %252 = vmatpush2.bf16.xpose.msra.mxu0 0
    %253 = vmatprep.subr.bf16.mxu0 0
    %254 = vmatpush2.bf16.xpose.msra.mxu0 0
    %255 = vmatprep.subr.bf16.mxu0 0
    %256 = vmatpush2.bf16.xpose.msra.mxu0 0
    %257 = vmatprep.subr.bf16.mxu0 0
    %258 = vmatpush2.bf16.xpose.msra.mxu0 0
    %259 = vmatprep.subr.bf16.mxu0 0
    %260 = vmatpush2.bf16.xpose.msra.mxu0 0
    %261 = vmatprep.subr.bf16.mxu0 0
    %262 = vmatpush2.bf16.xpose.msra.mxu0 0
    %263 = vmatprep.mubr.bf16.mxu0 %v93
    %264 = vmatmul.mubr.bf16.gmra.mxu0 %v92
    %v265 = vpop.f32.mrf.mxu0
    %v266 = vadd.f32 %v226, %v265
    %v267 = vpop.f32.mrf.mxu0
    %v268 = vpop.f32.mrf.mxu0
    %v269 = vpop.f32.mrf.mxu0
    %270 = vdwg.mxu0
    %271 = vmatprep.subr.bf16.mxu0 0
    %272 = vmatpush1.bf16.xpose.msra.mxu0 0
    %273 = vmatprep.subr.bf16.mxu0 0
    %274 = vmatpush1.bf16.xpose.msra.mxu0 0
    %275 = vmatprep.subr.bf16.mxu0 0
    %276 = vmatpush1.bf16.xpose.msra.mxu0 0
    %277 = vmatprep.subr.bf16.mxu0 0
    %278 = vmatpush1.bf16.xpose.msra.mxu0 0
    %279 = vmatprep.subr.bf16.mxu0 0
    %280 = vmatpush1.bf16.xpose.msra.mxu0 0
    %281 = vmatprep.subr.bf16.mxu0 0
    %282 = vmatpush1.bf16.xpose.msra.mxu0 0
    %283 = vmatprep.subr.bf16.mxu0 %v143
    %284 = vmatpush1.bf16.xpose.msra.mxu0 %v142
    %285 = vmatprep.subr.bf16.mxu0 %v135
    %286 = vmatpush1.bf16.xpose.msra.mxu0 %v134
    %287 = vmatprep.subr.bf16.mxu0 0
    %288 = vmatpush2.bf16.xpose.msra.mxu0 0
    %289 = vmatprep.subr.bf16.mxu0 0
    %290 = vmatpush2.bf16.xpose.msra.mxu0 0
    %291 = vmatprep.subr.bf16.mxu0 0
    %292 = vmatpush2.bf16.xpose.msra.mxu0 0
    %293 = vmatprep.subr.bf16.mxu0 0
    %294 = vmatpush2.bf16.xpose.msra.mxu0 0
    %295 = vmatprep.subr.bf16.mxu0 0
    %296 = vmatpush2.bf16.xpose.msra.mxu0 0
    %297 = vmatprep.subr.bf16.mxu0 0
    %298 = vmatpush2.bf16.xpose.msra.mxu0 0
    %299 = vmatprep.subr.bf16.mxu0 0
    %300 = vmatpush2.bf16.xpose.msra.mxu0 0
    %301 = vmatprep.subr.bf16.mxu0 0
    %302 = vmatpush2.bf16.xpose.msra.mxu0 0
    %303 = vmatprep.mubr.bf16.mxu0 %v95
    %304 = vmatmul.mubr.bf16.gmra.mxu0 %v94
    %v305 = vpop.f32.mrf.mxu0
    %v306 = vadd.f32 %v266, %v305
    %v307 = vpop.f32.mrf.mxu0
    %v308 = vpop.f32.mrf.mxu0
    %v309 = vpop.f32.mrf.mxu0
    %310 = vdwg.mxu0
    %v311 = vmax.f32 %v306, 0.0
    %vm312 = vcmask 254976
    %313 = vst.msk [vmem:[#allocation7] sm:$0x3] %vm312, %v311
    // Predicated region
    $region22: #{tpu_custom_call.1} parent=1 // pred_check
      _
    $region23: #{tpu_custom_call.1} parent=1 // pred_check_branch
      %315 = sbr.rel (0) target = $region25
    $region24: #{tpu_custom_call.1} parent=1 // pred_region
      %s317 = ssub.s32 32, 32
      %318 = vsyncadd [#allocation4], %s317
      %s320 = sshll.u32 [#allocation7], 4
      %s321 = int_to_ptr.vmem [resolvable:$true] %s320
      %323 = dma.vmem_to_hbm [thread:$0]  %s321, 32, %s3, [#allocation4]
    $region25: #{tpu_custom_call.1} parent=1 // pred_fallthru
      _
    // Predicated region
    $region26: #{tpu_custom_call.1} parent=1 // pred_check
      _
    $region27: #{tpu_custom_call.1} parent=1 // pred_check_branch
      %325 = sbr.rel (0) target = $region29
    $region28: #{tpu_custom_call.1} parent=1 // pred_region
      %326 = dma.done [#allocation4], 32
    $region29: #{tpu_custom_call.1} parent=1 // pred_fallthru
      _
    %327 = vsyncpa [#allocation3], 1
    %328 = vsyncpa [#allocation6], 1
    %329 = vsyncpa [#allocation4], 1

</llo_original>
